<compile_context>
chip_gen: v6e
topology: v6e:2x2x1
jax: 0.10.0
libtpu: 0.0.40
codegen_flags: <defaults>
</compile_context>

<pallas_src>
import functools

import jax
import jax.numpy as jnp
import numpy as np
from jax import lax
from jax.experimental import pallas as pl
from jax.experimental.pallas import tpu as pltpu

BN_EPS = 1e-5
LN_EPS = 1e-5
LANE = 128


def _round_up(x, m):
    return ((x + m - 1) // m) * m


def _triplet_kernel(idx_ref, embw_ref, params_ref, o_ref, acc_ref,
                    *, seq_len, num_features, num_branches, batch):
    """Grid = (vocab-chunk v,)  -- pure reduction over the folded-table chunks."""
    v = pl.program_id(0)
    nv = pl.num_programs(0)
    vc = embw_ref.shape[0]                       # vocab rows in this chunk
    n = idx_ref.shape[0]                         # G*B (sublane-padded) rows

    @pl.when(v == 0)
    def _():
        acc_ref[...] = jnp.zeros_like(acc_ref)

    # --- token-count histogram restricted to this vocab chunk -------------------------
    #   hist[i, j] = #{ s : idx[i, s] == v*vc + j }
    # fori_loop over s keeps live state at (n, vc); int32 accumulation, one cast at the
    # end.  Column extraction is a lane-masked reduce (no dynamic lane slicing).
    idx = idx_ref[...]                           # (n, S) int32
    base = v * vc
    iota_v = lax.broadcasted_iota(jnp.int32, (n, vc), 1) + base
    lane_iota = lax.broadcasted_iota(jnp.int32, (n, seq_len), 1)

    def body(s, hist):
        col = jnp.sum(jnp.where(lane_iota == s, idx, 0), axis=1, keepdims=True)  # (n,1)
        return hist + (col == iota_v).astype(jnp.int32)

    hist = lax.fori_loop(0, seq_len, body, jnp.zeros((n, vc), jnp.int32),
                         unroll=min(8, seq_len))

    # Partial (mean-pool ∘ Linear): counts @ (emb @ W^T) chunk, f32 accumulation on MXU.
    acc_ref[...] += jnp.dot(hist.astype(embw_ref.dtype), embw_ref[...],
                            preferred_element_type=jnp.float32)

    # --- fused epilogue on the last vocab chunk ---------------------------------------
    @pl.when(v == nv - 1)
    def _():
        params = params_ref[...]                 # (8, F_pad) packed 1-D params
        bias = params[0:1, :]
        bn_g = params[1:2, :]
        bn_b = params[2:3, :]
        ln_g = params[3:4, :]
        ln_b = params[4:5, :]

        inv_s = 1.0 / seq_len
        inv_f = 1.0 / num_features

        # Linear output (padded feature lanes: table cols and bias are 0 => y == 0).
        y_all = acc_ref[...] * inv_s + bias      # (n, F_pad)

        # Per-branch BatchNorm1d (training mode, biased batch variance) + LayerNorm.
        for g in range(num_branches):            # tiny static loop (G branches)
            lo = g * batch
            yg = y_all[lo:lo + batch]
            mu_b = jnp.mean(yg, axis=0, keepdims=True)
            var_b = jnp.mean((yg - mu_b) ** 2, axis=0, keepdims=True)
            yg = (yg - mu_b) * lax.rsqrt(var_b + BN_EPS) * bn_g + bn_b
            # padded lanes stay exactly 0 (their gamma/beta are padded with 0).

            # LayerNorm over the REAL feature count.  Padded lanes contribute 0 to both
            # sums; E[x^2] - mu^2 keeps the variance exact under zero padding.
            mu_f = jnp.sum(yg, axis=-1, keepdims=True) * inv_f
            ex2 = jnp.sum(yg * yg, axis=-1, keepdims=True) * inv_f
            var_f = ex2 - mu_f * mu_f
            yg = (yg - mu_f) * lax.rsqrt(var_f + LN_EPS) * ln_g + ln_b

            o_ref[lo:lo + batch, :] = yg.astype(o_ref.dtype)


def prepare_triplet_params(emb, w, b, bn_g, bn_b, ln_g, ln_b,
                           *, table_dtype=jnp.bfloat16, v_chunk=1024):
    """One-time weight prep (hoisted out of the forward): fold Linear into the table,
    pad to lane-dense tiles, pack the 1-D params.  Call once, reuse every forward."""
    V, F = emb.shape
    F_pad = _round_up(F, LANE)
    itemsize = np.dtype(table_dtype).itemsize

    # v7x safety: keep the double-buffered table chunk under ~24 MiB of VMEM.
    budget_rows = max(8, (((24 << 20) // (2 * F_pad * itemsize)) // 8) * 8)
    VC = min(_round_up(V, 8), _round_up(v_chunk, 8), budget_rows)
    V_pad = _round_up(V, VC)

    # Fold the Linear into the embedding table (done ONCE here, not per call).
    embw = jnp.dot(emb.astype(jnp.float32), w.astype(jnp.float32).T)          # (V, F)
    embw = jnp.zeros((V_pad, F_pad), jnp.float32).at[:V, :F].set(embw)
    embw = embw.astype(table_dtype)

    # Pack all 1-D params into one (8, F_pad) tile; padded lanes are 0.
    params = jnp.zeros((8, F_pad), jnp.float32)
    for i, p in enumerate((b, bn_g, bn_b, ln_g, ln_b)):
        params = params.at[i, :F].set(p.astype(jnp.float32))

    return {"embw": embw, "params": params, "num_features": F,
            "vocab_size": V, "v_chunk": VC}


def triplet_forward(x, prepared):
    """x: (B, S) or (G, B, S) int token ids; returns (B, F) or (G, B, F) f32.

    G (anchor/positive/negative) is folded into the matmul batch; BN statistics remain
    per-branch (matches forwarding each branch separately through the PyTorch module).
    """
    embw = prepared["embw"]
    params = prepared["params"]
    F = prepared["num_features"]
    VC = prepared["v_chunk"]
    V_pad, F_pad = embw.shape
    NV = V_pad // VC

    squeeze = (x.ndim == 2)
    if squeeze:
        x = x[None]
    G, B, S = x.shape
    N = G * B
    N_pad = _round_up(N, 8)

    x_flat = x.reshape(N, S).astype(jnp.int32)
    if N_pad != N:
        x_flat = jnp.concatenate(
            [x_flat, jnp.zeros((N_pad - N, S), jnp.int32)], axis=0)

    # Explicit VMEM budget (v5e default scoped limit is only 16 MiB; v7x physical 64 MiB).
    itemsize = embw.dtype.itemsize
    vmem_bytes = (2 * VC * F_pad * itemsize        # double-buffered table chunk
                  + 3 * N_pad * F_pad * 4          # acc scratch + output
                  + 2 * N_pad * S * 4              # token ids
                  + 2 * 8 * F_pad * 4)             # packed params
    vmem_limit = int(min(max(2 * vmem_bytes, 32 << 20), 64 << 20))

    kernel = functools.partial(_triplet_kernel, seq_len=S, num_features=F,
                               num_branches=G, batch=B)

    out = pl.pallas_call(
        kernel,
        out_shape=jax.ShapeDtypeStruct((N_pad, F_pad), jnp.float32),
        grid_spec=pltpu.PrefetchScalarGridSpec(
            num_scalar_prefetch=0,
            grid=(NV,),
            in_specs=[
                pl.BlockSpec((N_pad, S), lambda v: (0, 0)),      # token ids (DMA'd once)
                pl.BlockSpec((VC, F_pad), lambda v: (v, 0)),     # folded table chunk
                pl.BlockSpec((8, F_pad), lambda v: (0, 0)),      # packed params
            ],
            out_specs=pl.BlockSpec((N_pad, F_pad), lambda v: (0, 0)),
            scratch_shapes=[pltpu.VMEM((N_pad, F_pad), jnp.float32)],
        ),
        compiler_params=pltpu.CompilerParams(
            dimension_semantics=("arbitrary",),
            vmem_limit_bytes=vmem_limit),
    )(x_flat, embw, params)

    out = out[:N, :F].reshape(G, B, F)
    return out[0] if squeeze else out


def reference_forward(x, emb, w, b, bn_g, bn_b, ln_g, ln_b):
    """Pure-JAX reference mirroring the PyTorch forward (single branch, (B, S))."""
    e = emb[x]                                   # (B, S, F)  nn.Embedding
    pooled = jnp.mean(e, axis=1)                 # (B, F)     AdaptiveAvgPool1d(1)+flatten
    y = pooled @ w.T + b                         # Linear
    mu = jnp.mean(y, axis=0, keepdims=True)
    var = jnp.mean((y - mu) ** 2, axis=0, keepdims=True)
    y = (y - mu) / jnp.sqrt(var + BN_EPS) * bn_g + bn_b
    mu = jnp.mean(y, axis=-1, keepdims=True)
    var = jnp.mean((y - mu) ** 2, axis=-1, keepdims=True)
    y = (y - mu) / jnp.sqrt(var + LN_EPS) * ln_g + ln_b
    return y


if __name__ == "__main__":
    vocab_size = 32          # nn.Embedding num_embeddings (ctor arg "embedding_dim")
    num_features = 32        # feature width
    G, B, S = 3, 8, 8        # 3 triplet branches fused into one pallas_call

    key = jax.random.PRNGKey(0)
    k_idx, k_emb, k_w, k_b = jax.random.split(key, 4)

    x = jax.random.randint(k_idx, (G, B, S), 0, vocab_size, dtype=jnp.int32)

    emb = jax.random.normal(k_emb, (vocab_size, num_features), jnp.float32)
    bound = 1.0 / np.sqrt(num_features)
    w = jax.random.uniform(k_w, (num_features, num_features), jnp.float32, -bound, bound)
    b = jax.random.uniform(k_b, (num_features,), jnp.float32, -bound, bound)
    bn_g = jnp.ones((num_features,), jnp.float32)
    bn_b = jnp.zeros((num_features,), jnp.float32)
    ln_g = jnp.ones((num_features,), jnp.float32)
    ln_b = jnp.zeros((num_features,), jnp.float32)

    # f32 table path: tight numerical check against the PyTorch-equivalent reference.
    prep_f32 = prepare_triplet_params(emb, w, b, bn_g, bn_b, ln_g, ln_b,
                                      table_dtype=jnp.float32)
    out = jax.block_until_ready(triplet_forward(x, prep_f32))
    assert out.shape == (G, B, num_features)

    ref = jnp.stack([reference_forward(x[g], emb, w, b, bn_g, bn_b, ln_g, ln_b)
                     for g in range(G)])
    np.testing.assert_allclose(np.asarray(out), np.asarray(ref), rtol=1e-4, atol=1e-4)

    # Default bf16-table path (halves table DMA bytes, f32 accumulation): smoke-test,
    # since bf16 rounding of the folded table is amplified by the B-sample BN stats.
    prep_bf16 = prepare_triplet_params(emb, w, b, bn_g, bn_b, ln_g, ln_b)
    out_bf16 = jax.block_until_ready(triplet_forward(x, prep_bf16))
    assert out_bf16.shape == (G, B, num_features)
    assert bool(np.all(np.isfinite(np.asarray(out_bf16))))

    print("KERNEL_OK")
</pallas_src>

<mosaic_0001>
module attributes {stable_mosaic.version = 11 : i64} {
  func.func @_triplet_kernel(%arg0: i32, %arg1: memref<24x8xi32, #tpu.memory_space<vmem>>, %arg2: memref<32x128xf32, #tpu.memory_space<vmem>>, %arg3: memref<8x128xf32, #tpu.memory_space<vmem>>, %arg4: memref<24x128xf32, #tpu.memory_space<vmem>>, %arg5: memref<24x128xf32, #tpu.memory_space<vmem>>) attributes {dimension_semantics = [#tpu.dimension_semantics<arbitrary>], iteration_bounds = array<i64: 1>, scalar_prefetch = 0 : i64, scratch_operands = 1 : i64, tpu.core_type = #tpu.core_type<tc>, window_params = [{pipeline_mode = #tpu.pipeline_mode<synchronous>, transform_indices = @transform_0, window_bounds = array<i64: 24, 8>}, {transform_indices = @transform_1, window_bounds = array<i64: 32, 128>}, {pipeline_mode = #tpu.pipeline_mode<synchronous>, transform_indices = @transform_2, window_bounds = array<i64: 8, 128>}, {pipeline_mode = #tpu.pipeline_mode<synchronous>, transform_indices = @transform_3, window_bounds = array<i64: 24, 128>}]} {
    %c0_i32 = arith.constant 0 : i32
    %0 = arith.cmpi eq, %arg0, %c0_i32 : i32
    %1 = arith.extui %0 : i1 to i32
    %c0_i32_0 = arith.constant 0 : i32
    %2 = arith.cmpi ne, %1, %c0_i32_0 : i32
    scf.if %2 {
      %cst_28 = arith.constant 0.000000e+00 : f32
      %99 = vector.broadcast %cst_28 : f32 to vector<24x128xf32>
      %c0_29 = arith.constant 0 : index
      %c0_30 = arith.constant 0 : index
      %100 = vector.load %arg5[%c0_29, %c0_30] : memref<24x128xf32, #tpu.memory_space<vmem>>, vector<24x128xf32>
      tpu.vector_store %arg5[%c0_29, %c0_30], %99 {strides = array<i32>} : memref<24x128xf32, #tpu.memory_space<vmem>>, vector<24x128xf32>,
    } else {
    }
    %c0 = arith.constant 0 : index
    %c0_1 = arith.constant 0 : index
    %3 = vector.load %arg1[%c0, %c0_1] : memref<24x8xi32, #tpu.memory_space<vmem>>, vector<24x8xi32>
    %c32_i32 = arith.constant 32 : i32
    %4 = arith.muli %arg0, %c32_i32 : i32
    %5 = tpu.iota {dimensions = array<i32: 1>} : vector<24x32xi32>
    %6 = vector.broadcast %4 : i32 to vector<24x32xi32>
    %7 = arith.addi %5, %6 : vector<24x32xi32>
    %8 = tpu.iota {dimensions = array<i32: 1>} : vector<24x8xi32>
    %c0_i32_2 = arith.constant 0 : i32
    %9 = vector.broadcast %c0_i32_2 : i32 to vector<24x32xi32>
    %c0_i32_3 = arith.constant 0 : i32
    %10 = vector.broadcast %c0_i32_3 : i32 to vector<24x8xi32>
    %11 = arith.cmpi eq, %8, %10 : vector<24x8xi32>
    %c0_i32_4 = arith.constant 0 : i32
    %12 = vector.broadcast %c0_i32_4 : i32 to vector<24x8xi32>
    %13 = arith.select %11, %3, %12 : vector<24x8xi1>, vector<24x8xi32>
    %cst = arith.constant dense<0> : vector<24xi32>
    %14 = vector.multi_reduction <add>, %13, %cst [1] : vector<24x8xi32> to vector<24xi32>
    %15 = vector.shape_cast %14 : vector<24xi32> to vector<24x1xi32>
    %16 = vector.broadcast %15 : vector<24x1xi32> to vector<24x32xi32>
    %17 = arith.cmpi eq, %16, %7 : vector<24x32xi32>
    %18 = arith.extui %17 : vector<24x32xi1> to vector<24x32xi32>
    %19 = arith.addi %9, %18 : vector<24x32xi32>
    %c1_i32 = arith.constant 1 : i32
    %20 = vector.broadcast %c1_i32 : i32 to vector<24x8xi32>
    %21 = arith.cmpi eq, %8, %20 : vector<24x8xi32>
    %c0_i32_5 = arith.constant 0 : i32
    %22 = vector.broadcast %c0_i32_5 : i32 to vector<24x8xi32>
    %23 = arith.select %21, %3, %22 : vector<24x8xi1>, vector<24x8xi32>
    %cst_6 = arith.constant dense<0> : vector<24xi32>
    %24 = vector.multi_reduction <add>, %23, %cst_6 [1] : vector<24x8xi32> to vector<24xi32>
    %25 = vector.shape_cast %24 : vector<24xi32> to vector<24x1xi32>
    %26 = vector.broadcast %25 : vector<24x1xi32> to vector<24x32xi32>
    %27 = arith.cmpi eq, %26, %7 : vector<24x32xi32>
    %28 = arith.extui %27 : vector<24x32xi1> to vector<24x32xi32>
    %29 = arith.addi %19, %28 : vector<24x32xi32>
    %c2_i32 = arith.constant 2 : i32
    %30 = vector.broadcast %c2_i32 : i32 to vector<24x8xi32>
    %31 = arith.cmpi eq, %8, %30 : vector<24x8xi32>
    %c0_i32_7 = arith.constant 0 : i32
    %32 = vector.broadcast %c0_i32_7 : i32 to vector<24x8xi32>
    %33 = arith.select %31, %3, %32 : vector<24x8xi1>, vector<24x8xi32>
    %cst_8 = arith.constant dense<0> : vector<24xi32>
    %34 = vector.multi_reduction <add>, %33, %cst_8 [1] : vector<24x8xi32> to vector<24xi32>
    %35 = vector.shape_cast %34 : vector<24xi32> to vector<24x1xi32>
    %36 = vector.broadcast %35 : vector<24x1xi32> to vector<24x32xi32>
    %37 = arith.cmpi eq, %36, %7 : vector<24x32xi32>
    %38 = arith.extui %37 : vector<24x32xi1> to vector<24x32xi32>
    %39 = arith.addi %29, %38 : vector<24x32xi32>
    %c3_i32 = arith.constant 3 : i32
    %40 = vector.broadcast %c3_i32 : i32 to vector<24x8xi32>
    %41 = arith.cmpi eq, %8, %40 : vector<24x8xi32>
    %c0_i32_9 = arith.constant 0 : i32
    %42 = vector.broadcast %c0_i32_9 : i32 to vector<24x8xi32>
    %43 = arith.select %41, %3, %42 : vector<24x8xi1>, vector<24x8xi32>
    %cst_10 = arith.constant dense<0> : vector<24xi32>
    %44 = vector.multi_reduction <add>, %43, %cst_10 [1] : vector<24x8xi32> to vector<24xi32>
    %45 = vector.shape_cast %44 : vector<24xi32> to vector<24x1xi32>
    %46 = vector.broadcast %45 : vector<24x1xi32> to vector<24x32xi32>
    %47 = arith.cmpi eq, %46, %7 : vector<24x32xi32>
    %48 = arith.extui %47 : vector<24x32xi1> to vector<24x32xi32>
    %49 = arith.addi %39, %48 : vector<24x32xi32>
    %c4_i32 = arith.constant 4 : i32
    %50 = vector.broadcast %c4_i32 : i32 to vector<24x8xi32>
    %51 = arith.cmpi eq, %8, %50 : vector<24x8xi32>
    %c0_i32_11 = arith.constant 0 : i32
    %52 = vector.broadcast %c0_i32_11 : i32 to vector<24x8xi32>
    %53 = arith.select %51, %3, %52 : vector<24x8xi1>, vector<24x8xi32>
    %cst_12 = arith.constant dense<0> : vector<24xi32>
    %54 = vector.multi_reduction <add>, %53, %cst_12 [1] : vector<24x8xi32> to vector<24xi32>
    %55 = vector.shape_cast %54 : vector<24xi32> to vector<24x1xi32>
    %56 = vector.broadcast %55 : vector<24x1xi32> to vector<24x32xi32>
    %57 = arith.cmpi eq, %56, %7 : vector<24x32xi32>
    %58 = arith.extui %57 : vector<24x32xi1> to vector<24x32xi32>
    %59 = arith.addi %49, %58 : vector<24x32xi32>
    %c5_i32 = arith.constant 5 : i32
    %60 = vector.broadcast %c5_i32 : i32 to vector<24x8xi32>
    %61 = arith.cmpi eq, %8, %60 : vector<24x8xi32>
    %c0_i32_13 = arith.constant 0 : i32
    %62 = vector.broadcast %c0_i32_13 : i32 to vector<24x8xi32>
    %63 = arith.select %61, %3, %62 : vector<24x8xi1>, vector<24x8xi32>
    %cst_14 = arith.constant dense<0> : vector<24xi32>
    %64 = vector.multi_reduction <add>, %63, %cst_14 [1] : vector<24x8xi32> to vector<24xi32>
    %65 = vector.shape_cast %64 : vector<24xi32> to vector<24x1xi32>
    %66 = vector.broadcast %65 : vector<24x1xi32> to vector<24x32xi32>
    %67 = arith.cmpi eq, %66, %7 : vector<24x32xi32>
    %68 = arith.extui %67 : vector<24x32xi1> to vector<24x32xi32>
    %69 = arith.addi %59, %68 : vector<24x32xi32>
    %c6_i32 = arith.constant 6 : i32
    %70 = vector.broadcast %c6_i32 : i32 to vector<24x8xi32>
    %71 = arith.cmpi eq, %8, %70 : vector<24x8xi32>
    %c0_i32_15 = arith.constant 0 : i32
    %72 = vector.broadcast %c0_i32_15 : i32 to vector<24x8xi32>
    %73 = arith.select %71, %3, %72 : vector<24x8xi1>, vector<24x8xi32>
    %cst_16 = arith.constant dense<0> : vector<24xi32>
    %74 = vector.multi_reduction <add>, %73, %cst_16 [1] : vector<24x8xi32> to vector<24xi32>
    %75 = vector.shape_cast %74 : vector<24xi32> to vector<24x1xi32>
    %76 = vector.broadcast %75 : vector<24x1xi32> to vector<24x32xi32>
    %77 = arith.cmpi eq, %76, %7 : vector<24x32xi32>
    %78 = arith.extui %77 : vector<24x32xi1> to vector<24x32xi32>
    %79 = arith.addi %69, %78 : vector<24x32xi32>
    %c7_i32 = arith.constant 7 : i32
    %80 = vector.broadcast %c7_i32 : i32 to vector<24x8xi32>
    %81 = arith.cmpi eq, %8, %80 : vector<24x8xi32>
    %c0_i32_17 = arith.constant 0 : i32
    %82 = vector.broadcast %c0_i32_17 : i32 to vector<24x8xi32>
    %83 = arith.select %81, %3, %82 : vector<24x8xi1>, vector<24x8xi32>
    %cst_18 = arith.constant dense<0> : vector<24xi32>
    %84 = vector.multi_reduction <add>, %83, %cst_18 [1] : vector<24x8xi32> to vector<24xi32>
    %85 = vector.shape_cast %84 : vector<24xi32> to vector<24x1xi32>
    %86 = vector.broadcast %85 : vector<24x1xi32> to vector<24x32xi32>
    %87 = arith.cmpi eq, %86, %7 : vector<24x32xi32>
    %88 = arith.extui %87 : vector<24x32xi1> to vector<24x32xi32>
    %89 = arith.addi %79, %88 : vector<24x32xi32>
    %c8_i32 = arith.constant 8 : i32
    %c0_19 = arith.constant 0 : index
    %c0_20 = arith.constant 0 : index
    %90 = vector.load %arg5[%c0_19, %c0_20] : memref<24x128xf32, #tpu.memory_space<vmem>>, vector<24x128xf32>
    %91 = arith.sitofp %89 : vector<24x32xi32> to vector<24x32xf32>
    %c0_21 = arith.constant 0 : index
    %c0_22 = arith.constant 0 : index
    %92 = vector.load %arg2[%c0_21, %c0_22] : memref<32x128xf32, #tpu.memory_space<vmem>>, vector<32x128xf32>
    %cst_23 = arith.constant dense<0.000000e+00> : vector<24x128xf32>
    %93 = tpu.matmul %91, %92, %cst_23 {dimension_numbers = #tpu.dot_dimension_numbers<[1], [0], [0], [1], [0, 0, 1, 1], [], []>} : vector<24x32xf32>, vector<32x128xf32>, vector<24x128xf32> -> vector<24x128xf32>
    %94 = arith.addf %90, %93 : vector<24x128xf32>
    %c0_24 = arith.constant 0 : index
    %c0_25 = arith.constant 0 : index
    %95 = vector.load %arg5[%c0_24, %c0_25] : memref<24x128xf32, #tpu.memory_space<vmem>>, vector<24x128xf32>
    tpu.vector_store %arg5[%c0_24, %c0_25], %94 {strides = array<i32>} : memref<24x128xf32, #tpu.memory_space<vmem>>, vector<24x128xf32>,
    %c0_i32_26 = arith.constant 0 : i32
    %96 = arith.cmpi eq, %arg0, %c0_i32_26 : i32
    %97 = arith.extui %96 : i1 to i32
    %c0_i32_27 = arith.constant 0 : i32
    %98 = arith.cmpi ne, %97, %c0_i32_27 : i32
    scf.if %98 {
      %c0_28 = arith.constant 0 : index
      %c0_29 = arith.constant 0 : index
      %99 = vector.load %arg3[%c0_28, %c0_29] : memref<8x128xf32, #tpu.memory_space<vmem>>, vector<8x128xf32>
      %100 = vector.extract_strided_slice %99 {offsets = [0, 0], sizes = [1, 128], strides = [1, 1]} : vector<8x128xf32> to vector<1x128xf32>
      %101 = vector.extract_strided_slice %99 {offsets = [1, 0], sizes = [1, 128], strides = [1, 1]} : vector<8x128xf32> to vector<1x128xf32>
      %102 = vector.extract_strided_slice %99 {offsets = [2, 0], sizes = [1, 128], strides = [1, 1]} : vector<8x128xf32> to vector<1x128xf32>
      %103 = vector.extract_strided_slice %99 {offsets = [3, 0], sizes = [1, 128], strides = [1, 1]} : vector<8x128xf32> to vector<1x128xf32>
      %104 = vector.extract_strided_slice %99 {offsets = [4, 0], sizes = [1, 128], strides = [1, 1]} : vector<8x128xf32> to vector<1x128xf32>
      %c0_30 = arith.constant 0 : index
      %c0_31 = arith.constant 0 : index
      %105 = vector.load %arg5[%c0_30, %c0_31] : memref<24x128xf32, #tpu.memory_space<vmem>>, vector<24x128xf32>
      %cst_32 = arith.constant 1.250000e-01 : f32
      %106 = vector.broadcast %cst_32 : f32 to vector<24x128xf32>
      %107 = arith.mulf %105, %106 : vector<24x128xf32>
      %108 = vector.broadcast %100 : vector<1x128xf32> to vector<24x128xf32>
      %109 = arith.addf %107, %108 : vector<24x128xf32>
      %110 = vector.extract_strided_slice %109 {offsets = [0, 0], sizes = [8, 128], strides = [1, 1]} : vector<24x128xf32> to vector<8x128xf32>
      %cst_33 = arith.constant dense<0.000000e+00> : vector<128xf32>
      %111 = vector.multi_reduction <add>, %110, %cst_33 [0] : vector<8x128xf32> to vector<128xf32>
      %112 = vector.shape_cast %111 : vector<128xf32> to vector<1x128xf32>
      %cst_34 = arith.constant 8.000000e+00 : f32
      %113 = vector.broadcast %cst_34 : f32 to vector<1x128xf32>
      %114 = arith.divf %112, %113 : vector<1x128xf32>
      %115 = vector.broadcast %114 : vector<1x128xf32> to vector<8x128xf32>
      %116 = arith.subf %110, %115 : vector<8x128xf32>
      %117 = arith.mulf %116, %116 : vector<8x128xf32>
      %cst_35 = arith.constant dense<0.000000e+00> : vector<128xf32>
      %118 = vector.multi_reduction <add>, %117, %cst_35 [0] : vector<8x128xf32> to vector<128xf32>
      %119 = vector.shape_cast %118 : vector<128xf32> to vector<1x128xf32>
      %cst_36 = arith.constant 8.000000e+00 : f32
      %120 = vector.broadcast %cst_36 : f32 to vector<1x128xf32>
      %121 = arith.divf %119, %120 : vector<1x128xf32>
      %122 = vector.broadcast %114 : vector<1x128xf32> to vector<8x128xf32>
      %123 = arith.subf %110, %122 : vector<8x128xf32>
      %cst_37 = arith.constant 9.99999974E-6 : f32
      %124 = vector.broadcast %cst_37 : f32 to vector<1x128xf32>
      %125 = arith.addf %121, %124 : vector<1x128xf32>
      %126 = math.rsqrt %125 : vector<1x128xf32>
      %127 = vector.broadcast %126 : vector<1x128xf32> to vector<8x128xf32>
      %128 = arith.mulf %123, %127 : vector<8x128xf32>
      %129 = vector.broadcast %101 : vector<1x128xf32> to vector<8x128xf32>
      %130 = arith.mulf %128, %129 : vector<8x128xf32>
      %131 = vector.broadcast %102 : vector<1x128xf32> to vector<8x128xf32>
      %132 = arith.addf %130, %131 : vector<8x128xf32>
      %cst_38 = arith.constant dense<0.000000e+00> : vector<8xf32>
      %133 = vector.multi_reduction <add>, %132, %cst_38 [1] : vector<8x128xf32> to vector<8xf32>
      %134 = vector.shape_cast %133 : vector<8xf32> to vector<8x1xf32>
      %cst_39 = arith.constant 3.125000e-02 : f32
      %135 = vector.broadcast %cst_39 : f32 to vector<8x1xf32>
      %136 = arith.mulf %134, %135 : vector<8x1xf32>
      %137 = arith.mulf %132, %132 : vector<8x128xf32>
      %cst_40 = arith.constant dense<0.000000e+00> : vector<8xf32>
      %138 = vector.multi_reduction <add>, %137, %cst_40 [1] : vector<8x128xf32> to vector<8xf32>
      %139 = vector.shape_cast %138 : vector<8xf32> to vector<8x1xf32>
      %cst_41 = arith.constant 3.125000e-02 : f32
      %140 = vector.broadcast %cst_41 : f32 to vector<8x1xf32>
      %141 = arith.mulf %139, %140 : vector<8x1xf32>
      %142 = arith.mulf %136, %136 : vector<8x1xf32>
      %143 = arith.subf %141, %142 : vector<8x1xf32>
      %144 = vector.broadcast %136 : vector<8x1xf32> to vector<8x128xf32>
      %145 = arith.subf %132, %144 : vector<8x128xf32>
      %cst_42 = arith.constant 9.99999974E-6 : f32
      %146 = vector.broadcast %cst_42 : f32 to vector<8x1xf32>
      %147 = arith.addf %143, %146 : vector<8x1xf32>
      %148 = math.rsqrt %147 : vector<8x1xf32>
      %149 = vector.broadcast %148 : vector<8x1xf32> to vector<8x128xf32>
      %150 = arith.mulf %145, %149 : vector<8x128xf32>
      %151 = vector.broadcast %103 : vector<1x128xf32> to vector<8x128xf32>
      %152 = arith.mulf %150, %151 : vector<8x128xf32>
      %153 = vector.broadcast %104 : vector<1x128xf32> to vector<8x128xf32>
      %154 = arith.addf %152, %153 : vector<8x128xf32>
      %c0_43 = arith.constant 0 : index
      %c0_44 = arith.constant 0 : index
      %155 = vector.load %arg4[%c0_43, %c0_44] : memref<24x128xf32, #tpu.memory_space<vmem>>, vector<8x128xf32>
      tpu.vector_store %arg4[%c0_43, %c0_44], %154 {strides = array<i32>} : memref<24x128xf32, #tpu.memory_space<vmem>>, vector<8x128xf32>,
      %156 = vector.extract_strided_slice %109 {offsets = [8, 0], sizes = [8, 128], strides = [1, 1]} : vector<24x128xf32> to vector<8x128xf32>
      %cst_45 = arith.constant dense<0.000000e+00> : vector<128xf32>
      %157 = vector.multi_reduction <add>, %156, %cst_45 [0] : vector<8x128xf32> to vector<128xf32>
      %158 = vector.shape_cast %157 : vector<128xf32> to vector<1x128xf32>
      %cst_46 = arith.constant 8.000000e+00 : f32
      %159 = vector.broadcast %cst_46 : f32 to vector<1x128xf32>
      %160 = arith.divf %158, %159 : vector<1x128xf32>
      %161 = vector.broadcast %160 : vector<1x128xf32> to vector<8x128xf32>
      %162 = arith.subf %156, %161 : vector<8x128xf32>
      %163 = arith.mulf %162, %162 : vector<8x128xf32>
      %cst_47 = arith.constant dense<0.000000e+00> : vector<128xf32>
      %164 = vector.multi_reduction <add>, %163, %cst_47 [0] : vector<8x128xf32> to vector<128xf32>
      %165 = vector.shape_cast %164 : vector<128xf32> to vector<1x128xf32>
      %cst_48 = arith.constant 8.000000e+00 : f32
      %166 = vector.broadcast %cst_48 : f32 to vector<1x128xf32>
      %167 = arith.divf %165, %166 : vector<1x128xf32>
      %168 = vector.broadcast %160 : vector<1x128xf32> to vector<8x128xf32>
      %169 = arith.subf %156, %168 : vector<8x128xf32>
      %cst_49 = arith.constant 9.99999974E-6 : f32
      %170 = vector.broadcast %cst_49 : f32 to vector<1x128xf32>
      %171 = arith.addf %167, %170 : vector<1x128xf32>
      %172 = math.rsqrt %171 : vector<1x128xf32>
      %173 = vector.broadcast %172 : vector<1x128xf32> to vector<8x128xf32>
      %174 = arith.mulf %169, %173 : vector<8x128xf32>
      %175 = vector.broadcast %101 : vector<1x128xf32> to vector<8x128xf32>
      %176 = arith.mulf %174, %175 : vector<8x128xf32>
      %177 = vector.broadcast %102 : vector<1x128xf32> to vector<8x128xf32>
      %178 = arith.addf %176, %177 : vector<8x128xf32>
      %cst_50 = arith.constant dense<0.000000e+00> : vector<8xf32>
      %179 = vector.multi_reduction <add>, %178, %cst_50 [1] : vector<8x128xf32> to vector<8xf32>
      %180 = vector.shape_cast %179 : vector<8xf32> to vector<8x1xf32>
      %cst_51 = arith.constant 3.125000e-02 : f32
      %181 = vector.broadcast %cst_51 : f32 to vector<8x1xf32>
      %182 = arith.mulf %180, %181 : vector<8x1xf32>
      %183 = arith.mulf %178, %178 : vector<8x128xf32>
      %cst_52 = arith.constant dense<0.000000e+00> : vector<8xf32>
      %184 = vector.multi_reduction <add>, %183, %cst_52 [1] : vector<8x128xf32> to vector<8xf32>
      %185 = vector.shape_cast %184 : vector<8xf32> to vector<8x1xf32>
      %cst_53 = arith.constant 3.125000e-02 : f32
      %186 = vector.broadcast %cst_53 : f32 to vector<8x1xf32>
      %187 = arith.mulf %185, %186 : vector<8x1xf32>
      %188 = arith.mulf %182, %182 : vector<8x1xf32>
      %189 = arith.subf %187, %188 : vector<8x1xf32>
      %190 = vector.broadcast %182 : vector<8x1xf32> to vector<8x128xf32>
      %191 = arith.subf %178, %190 : vector<8x128xf32>
      %cst_54 = arith.constant 9.99999974E-6 : f32
      %192 = vector.broadcast %cst_54 : f32 to vector<8x1xf32>
      %193 = arith.addf %189, %192 : vector<8x1xf32>
      %194 = math.rsqrt %193 : vector<8x1xf32>
      %195 = vector.broadcast %194 : vector<8x1xf32> to vector<8x128xf32>
      %196 = arith.mulf %191, %195 : vector<8x128xf32>
      %197 = vector.broadcast %103 : vector<1x128xf32> to vector<8x128xf32>
      %198 = arith.mulf %196, %197 : vector<8x128xf32>
      %199 = vector.broadcast %104 : vector<1x128xf32> to vector<8x128xf32>
      %200 = arith.addf %198, %199 : vector<8x128xf32>
      %c8 = arith.constant 8 : index
      %c0_55 = arith.constant 0 : index
      %201 = vector.load %arg4[%c8, %c0_55] : memref<24x128xf32, #tpu.memory_space<vmem>>, vector<8x128xf32>
      tpu.vector_store %arg4[%c8, %c0_55], %200 {strides = array<i32>} : memref<24x128xf32, #tpu.memory_space<vmem>>, vector<8x128xf32>,
      %202 = vector.extract_strided_slice %109 {offsets = [16, 0], sizes = [8, 128], strides = [1, 1]} : vector<24x128xf32> to vector<8x128xf32>
      %cst_56 = arith.constant dense<0.000000e+00> : vector<128xf32>
      %203 = vector.multi_reduction <add>, %202, %cst_56 [0] : vector<8x128xf32> to vector<128xf32>
      %204 = vector.shape_cast %203 : vector<128xf32> to vector<1x128xf32>
      %cst_57 = arith.constant 8.000000e+00 : f32
      %205 = vector.broadcast %cst_57 : f32 to vector<1x128xf32>
      %206 = arith.divf %204, %205 : vector<1x128xf32>
      %207 = vector.broadcast %206 : vector<1x128xf32> to vector<8x128xf32>
      %208 = arith.subf %202, %207 : vector<8x128xf32>
      %209 = arith.mulf %208, %208 : vector<8x128xf32>
      %cst_58 = arith.constant dense<0.000000e+00> : vector<128xf32>
      %210 = vector.multi_reduction <add>, %209, %cst_58 [0] : vector<8x128xf32> to vector<128xf32>
      %211 = vector.shape_cast %210 : vector<128xf32> to vector<1x128xf32>
      %cst_59 = arith.constant 8.000000e+00 : f32
      %212 = vector.broadcast %cst_59 : f32 to vector<1x128xf32>
      %213 = arith.divf %211, %212 : vector<1x128xf32>
      %214 = vector.broadcast %206 : vector<1x128xf32> to vector<8x128xf32>
      %215 = arith.subf %202, %214 : vector<8x128xf32>
      %cst_60 = arith.constant 9.99999974E-6 : f32
      %216 = vector.broadcast %cst_60 : f32 to vector<1x128xf32>
      %217 = arith.addf %213, %216 : vector<1x128xf32>
      %218 = math.rsqrt %217 : vector<1x128xf32>
      %219 = vector.broadcast %218 : vector<1x128xf32> to vector<8x128xf32>
      %220 = arith.mulf %215, %219 : vector<8x128xf32>
      %221 = vector.broadcast %101 : vector<1x128xf32> to vector<8x128xf32>
      %222 = arith.mulf %220, %221 : vector<8x128xf32>
      %223 = vector.broadcast %102 : vector<1x128xf32> to vector<8x128xf32>
      %224 = arith.addf %222, %223 : vector<8x128xf32>
      %cst_61 = arith.constant dense<0.000000e+00> : vector<8xf32>
      %225 = vector.multi_reduction <add>, %224, %cst_61 [1] : vector<8x128xf32> to vector<8xf32>
      %226 = vector.shape_cast %225 : vector<8xf32> to vector<8x1xf32>
      %cst_62 = arith.constant 3.125000e-02 : f32
      %227 = vector.broadcast %cst_62 : f32 to vector<8x1xf32>
      %228 = arith.mulf %226, %227 : vector<8x1xf32>
      %229 = arith.mulf %224, %224 : vector<8x128xf32>
      %cst_63 = arith.constant dense<0.000000e+00> : vector<8xf32>
      %230 = vector.multi_reduction <add>, %229, %cst_63 [1] : vector<8x128xf32> to vector<8xf32>
      %231 = vector.shape_cast %230 : vector<8xf32> to vector<8x1xf32>
      %cst_64 = arith.constant 3.125000e-02 : f32
      %232 = vector.broadcast %cst_64 : f32 to vector<8x1xf32>
      %233 = arith.mulf %231, %232 : vector<8x1xf32>
      %234 = arith.mulf %228, %228 : vector<8x1xf32>
      %235 = arith.subf %233, %234 : vector<8x1xf32>
      %236 = vector.broadcast %228 : vector<8x1xf32> to vector<8x128xf32>
      %237 = arith.subf %224, %236 : vector<8x128xf32>
      %cst_65 = arith.constant 9.99999974E-6 : f32
      %238 = vector.broadcast %cst_65 : f32 to vector<8x1xf32>
      %239 = arith.addf %235, %238 : vector<8x1xf32>
      %240 = math.rsqrt %239 : vector<8x1xf32>
      %241 = vector.broadcast %240 : vector<8x1xf32> to vector<8x128xf32>
      %242 = arith.mulf %237, %241 : vector<8x128xf32>
      %243 = vector.broadcast %103 : vector<1x128xf32> to vector<8x128xf32>
      %244 = arith.mulf %242, %243 : vector<8x128xf32>
      %245 = vector.broadcast %104 : vector<1x128xf32> to vector<8x128xf32>
      %246 = arith.addf %244, %245 : vector<8x128xf32>
      %c16 = arith.constant 16 : index
      %c0_66 = arith.constant 0 : index
      %247 = vector.load %arg4[%c16, %c0_66] : memref<24x128xf32, #tpu.memory_space<vmem>>, vector<8x128xf32>
      tpu.vector_store %arg4[%c16, %c0_66], %246 {strides = array<i32>} : memref<24x128xf32, #tpu.memory_space<vmem>>, vector<8x128xf32>,
    } else {
    }
    return
  }
  func.func @transform_0(%arg0: i32) -> (i32, i32) {
    %c0_i32 = arith.constant 0 : i32
    %c0_i32_0 = arith.constant 0 : i32
    %c0_i32_1 = arith.constant 0 : i32
    return %c0_i32, %c0_i32_0 : i32, i32
  }
  func.func @transform_1(%arg0: i32) -> (i32, i32) {
    %c0_i32 = arith.constant 0 : i32
    %c0_i32_0 = arith.constant 0 : i32
    return %arg0, %c0_i32 : i32, i32
  }
  func.func @transform_2(%arg0: i32) -> (i32, i32) {
    %c0_i32 = arith.constant 0 : i32
    %c0_i32_0 = arith.constant 0 : i32
    %c0_i32_1 = arith.constant 0 : i32
    return %c0_i32, %c0_i32_0 : i32, i32
  }
  func.func @transform_3(%arg0: i32) -> (i32, i32) {
    %c0_i32 = arith.constant 0 : i32
    %c0_i32_0 = arith.constant 0 : i32
    %c0_i32_1 = arith.constant 0 : i32
    return %c0_i32, %c0_i32_0 : i32, i32
  }
}

</mosaic_0001>

<llo_original>
// kernel: tpu_custom_call.1
$region0: #{tpu_custom_call.1}
  #allocation0 [shape = 'u32[]', space=smem, size = 0x4, offset = 0x4, fixed_abs, tag = 'smem constant byte address 0x4 - core index']
  #allocation1 [shape = 'u32[144,128]{1,0:T(1,128)}', space=vmem, size = 0x12000, scoped, tag = 'internal scratch']
  #allocation2 [shape = 'f32[24,128]{1,0:T(8,128)}', space=vmem, size = 0x3000, scoped, tag = 'scratch operand']
  %s0 = inlined_call_operand.vmem [shape: s32[24,8], index: 0, kind: input, shape index: {}]
  %s1 = inlined_call_operand.vmem [shape: f32[32,128], index: 1, kind: input, shape index: {}]
  %s2 = inlined_call_operand.hbm [shape: f32[8,128], index: 2, kind: input, shape index: {}]
  %s3 = inlined_call_operand.hbm [shape: f32[24,128], index: 3, kind: output, shape index: {}]
  %s4 = sld [smem:[#allocation0]]
  $region34: #{tpu_custom_call.1} parent=0
    _
  %s6 = ssub.s32 1, %s4
  %s7 = scalar_select 0, %s6, %s4
  $region1: #{tpu_custom_call.1} parent=0
    #allocation3 [shape = 'u8[4096]{0}', space=vmem, size = 0x1000, scoped, tag = 'input window, operand 2, single buffered']
    #allocation4 [shape = 's32[1]{0}', space=sflag, size = 0x4, scoped, tag = 'scoped memory for tpu_custom_call.1']
    #allocation5 [shape = 's32[1]{0}', space=sflag, size = 0x4, scoped, tag = 'scoped memory for tpu_custom_call.1']
    #allocation6 [shape = 'u8[12288]{0}', space=vmem, size = 0x3000, scoped, tag = 'output window, operand 0, single buffered']
    %8 = vsyncpa [#allocation4], 0
    %9 = vsyncpa [#allocation5], 0
    // Predicated region
    $region2: #{tpu_custom_call.1} parent=1 // pred_check
      _
    $region3: #{tpu_custom_call.1} parent=1 // pred_check_branch
      %11 = sbr.rel (0) target = $region5
    $region4: #{tpu_custom_call.1} parent=1 // pred_region
      _
    $region5: #{tpu_custom_call.1} parent=1 // pred_fallthru
      _
    // Predicated region
    $region6: #{tpu_custom_call.1} parent=1 // pred_check
      _
    $region7: #{tpu_custom_call.1} parent=1 // pred_check_branch
      %13 = sbr.rel (0) target = $region9
    $region8: #{tpu_custom_call.1} parent=1 // pred_region
      _
    $region9: #{tpu_custom_call.1} parent=1 // pred_fallthru
      _
    // Predicated region
    $region10: #{tpu_custom_call.1} parent=1 // pred_check
      _
    $region11: #{tpu_custom_call.1} parent=1 // pred_check_branch
      %15 = sbr.rel (0) target = $region13
    $region12: #{tpu_custom_call.1} parent=1 // pred_region
      %s17 = ssub.s32 128, 128
      %18 = vsyncadd [#allocation4], %s17
      %s20 = sshll.u32 [#allocation3], 4
      %s21 = int_to_ptr.vmem [resolvable:$true] %s20
      %23 = dma.hbm_to_vmem [thread:$0]  %s2, 128, %s21, [#allocation4]
    $region13: #{tpu_custom_call.1} parent=1 // pred_fallthru
      _
    // Predicated region
    $region14: #{tpu_custom_call.1} parent=1 // pred_check
      _
    $region15: #{tpu_custom_call.1} parent=1 // pred_check_branch
      %25 = sbr.rel (0) target = $region17
    $region16: #{tpu_custom_call.1} parent=1 // pred_region
      %26 = dma.done [#allocation4], 128
    $region17: #{tpu_custom_call.1} parent=1 // pred_fallthru
      _
    %p27 = scmp.eq.s32.totalorder 0, 0
    // Predicated region
    $region18: #{tpu_custom_call.1} parent=1 // pred_check
      %p28 = pneg %p27
    $region19: #{tpu_custom_call.1} parent=1 // pred_check_branch
      %30 = sbr.rel (%p28) target = $region21
    $region20: #{tpu_custom_call.1} parent=1 // pred_region
      %31 = vst [vmem:[#allocation2] sm:$0xff] 0.0
      %32 = vst [vmem:[#allocation2 + $0x8] sm:$0xff] 0.0
      %33 = vst [vmem:[#allocation2 + $0x10] sm:$0xff] 0.0
    $region21: #{tpu_custom_call.1} parent=1 // pred_fallthru
      _
    %v34 = vld [vmem:[%s0] sm:$0xff]
    %v35 = vld [vmem:[%s0 + $0x8] sm:$0xff]
    %v36 = vld [vmem:[%s0 + $0x10] sm:$0xff]
    %s37 = smul.u32 0, 32
    %v38 = vlaneseq
    %v39 = vand.u32 %v38, 127
    %v40 = vstv %s37
    %v41 = vadd.s32 %v39, %v40
    %vm42 = vcmp.eq.s32.totalorder %v39, 0
    %v43 = vsel %vm42, %v34, 0
    %v44 = vsel %vm42, %v35, 0
    %v45 = vsel %vm42, %v36, 0
    %vm46 = vcmask 64512
    %v47 = vsel %vm46, %v43, 0
    %v48 = vand.u32 %v47, 65535
    %v49 = vshrl.u32 %v47, 16
    %v50 = vcvt.s32.f32 %v48
    %v51 = vcvt.s32.f32 %v49
    %52 = vadd.xlane.f32.xlu0 %v50
    %v53 = vpop.xlane.xlu0 %52
    %54 = vadd.xlane.f32.xlu0 %v51
    %v55 = vpop.xlane.xlu0 %54
    %v56 = vcvt.f32.s32 %v53
    %v57 = vcvt.f32.s32 %v55
    %v58 = vshll.u32 %v57, 16
    %v59 = vadd.s32 %v58, %v56
    %v60 = vsel %vm46, %v44, 0
    %v61 = vand.u32 %v60, 65535
    %v62 = vshrl.u32 %v60, 16
    %v63 = vcvt.s32.f32 %v61
    %v64 = vcvt.s32.f32 %v62
    %65 = vadd.xlane.f32.xlu0 %v63
    %v66 = vpop.xlane.xlu0 %65
    %67 = vadd.xlane.f32.xlu0 %v64
    %v68 = vpop.xlane.xlu0 %67
    %v69 = vcvt.f32.s32 %v66
    %v70 = vcvt.f32.s32 %v68
    %v71 = vshll.u32 %v70, 16
    %v72 = vadd.s32 %v71, %v69
    %v73 = vsel %vm46, %v45, 0
    %v74 = vand.u32 %v73, 65535
    %v75 = vshrl.u32 %v73, 16
    %v76 = vcvt.s32.f32 %v74
    %v77 = vcvt.s32.f32 %v75
    %78 = vadd.xlane.f32.xlu0 %v76
    %v79 = vpop.xlane.xlu0 %78
    %80 = vadd.xlane.f32.xlu0 %v77
    %v81 = vpop.xlane.xlu0 %80
    %v82 = vcvt.f32.s32 %v79
    %v83 = vcvt.f32.s32 %v81
    %v84 = vshll.u32 %v83, 16
    %v85 = vadd.s32 %v84, %v82
    %vm86 = vcmp.eq.s32.totalorder %v59, %v41
    %vm87 = vcmp.eq.s32.totalorder %v72, %v41
    %vm88 = vcmp.eq.s32.totalorder %v85, %v41
    %v89 = vsel %vm86, 1, 0
    %v90 = vsel %vm87, 1, 0
    %v91 = vsel %vm88, 1, 0
    %vm92 = vcmp.eq.s32.totalorder %v39, 1
    %v93 = vsel %vm92, %v34, 0
    %v94 = vsel %vm92, %v35, 0
    %v95 = vsel %vm92, %v36, 0
    %v96 = vsel %vm46, %v93, 0
    %v97 = vand.u32 %v96, 65535
    %v98 = vshrl.u32 %v96, 16
    %v99 = vcvt.s32.f32 %v97
    %v100 = vcvt.s32.f32 %v98
    %101 = vadd.xlane.f32.xlu0 %v99
    %v102 = vpop.xlane.xlu0 %101
    %103 = vadd.xlane.f32.xlu0 %v100
    %v104 = vpop.xlane.xlu0 %103
    %v105 = vcvt.f32.s32 %v102
    %v106 = vcvt.f32.s32 %v104
    %v107 = vshll.u32 %v106, 16
    %v108 = vadd.s32 %v107, %v105
    %v109 = vsel %vm46, %v94, 0
    %v110 = vand.u32 %v109, 65535
    %v111 = vshrl.u32 %v109, 16
    %v112 = vcvt.s32.f32 %v110
    %v113 = vcvt.s32.f32 %v111
    %114 = vadd.xlane.f32.xlu0 %v112
    %v115 = vpop.xlane.xlu0 %114
    %116 = vadd.xlane.f32.xlu0 %v113
    %v117 = vpop.xlane.xlu0 %116
    %v118 = vcvt.f32.s32 %v115
    %v119 = vcvt.f32.s32 %v117
    %v120 = vshll.u32 %v119, 16
    %v121 = vadd.s32 %v120, %v118
    %v122 = vsel %vm46, %v95, 0
    %v123 = vand.u32 %v122, 65535
    %v124 = vshrl.u32 %v122, 16
    %v125 = vcvt.s32.f32 %v123
    %v126 = vcvt.s32.f32 %v124
    %127 = vadd.xlane.f32.xlu0 %v125
    %v128 = vpop.xlane.xlu0 %127
    %129 = vadd.xlane.f32.xlu0 %v126
    %v130 = vpop.xlane.xlu0 %129
    %v131 = vcvt.f32.s32 %v128
    %v132 = vcvt.f32.s32 %v130
    %v133 = vshll.u32 %v132, 16
    %v134 = vadd.s32 %v133, %v131
    %vm135 = vcmp.eq.s32.totalorder %v108, %v41
    %vm136 = vcmp.eq.s32.totalorder %v121, %v41
    %vm137 = vcmp.eq.s32.totalorder %v134, %v41
    %v138 = vsel %vm135, 1, 0
    %v139 = vsel %vm136, 1, 0
    %v140 = vsel %vm137, 1, 0
    %v141 = vadd.s32 %v89, %v138
    %v142 = vadd.s32 %v90, %v139
    %v143 = vadd.s32 %v91, %v140
    %vm144 = vcmp.eq.s32.totalorder %v39, 2
    %v145 = vsel %vm144, %v34, 0
    %v146 = vsel %vm144, %v35, 0
    %v147 = vsel %vm144, %v36, 0
    %v148 = vsel %vm46, %v145, 0
    %v149 = vand.u32 %v148, 65535
    %v150 = vshrl.u32 %v148, 16
    %v151 = vcvt.s32.f32 %v149
    %v152 = vcvt.s32.f32 %v150
    %153 = vadd.xlane.f32.xlu0 %v151
    %v154 = vpop.xlane.xlu0 %153
    %155 = vadd.xlane.f32.xlu0 %v152
    %v156 = vpop.xlane.xlu0 %155
    %v157 = vcvt.f32.s32 %v154
    %v158 = vcvt.f32.s32 %v156
    %v159 = vshll.u32 %v158, 16
    %v160 = vadd.s32 %v159, %v157
    %v161 = vsel %vm46, %v146, 0
    %v162 = vand.u32 %v161, 65535
    %v163 = vshrl.u32 %v161, 16
    %v164 = vcvt.s32.f32 %v162
    %v165 = vcvt.s32.f32 %v163
    %166 = vadd.xlane.f32.xlu0 %v164
    %v167 = vpop.xlane.xlu0 %166
    %168 = vadd.xlane.f32.xlu0 %v165
    %v169 = vpop.xlane.xlu0 %168
    %v170 = vcvt.f32.s32 %v167
    %v171 = vcvt.f32.s32 %v169
    %v172 = vshll.u32 %v171, 16
    %v173 = vadd.s32 %v172, %v170
    %v174 = vsel %vm46, %v147, 0
    %v175 = vand.u32 %v174, 65535
    %v176 = vshrl.u32 %v174, 16
    %v177 = vcvt.s32.f32 %v175
    %v178 = vcvt.s32.f32 %v176
    %179 = vadd.xlane.f32.xlu0 %v177
    %v180 = vpop.xlane.xlu0 %179
    %181 = vadd.xlane.f32.xlu0 %v178
    %v182 = vpop.xlane.xlu0 %181
    %v183 = vcvt.f32.s32 %v180
    %v184 = vcvt.f32.s32 %v182
    %v185 = vshll.u32 %v184, 16
    %v186 = vadd.s32 %v185, %v183
    %vm187 = vcmp.eq.s32.totalorder %v160, %v41
    %vm188 = vcmp.eq.s32.totalorder %v173, %v41
    %vm189 = vcmp.eq.s32.totalorder %v186, %v41
    %v190 = vsel %vm187, 1, 0
    %v191 = vsel %vm188, 1, 0
    %v192 = vsel %vm189, 1, 0
    %v193 = vadd.s32 %v141, %v190
    %v194 = vadd.s32 %v142, %v191
    %v195 = vadd.s32 %v143, %v192
    %vm196 = vcmp.eq.s32.totalorder %v39, 3
    %v197 = vsel %vm196, %v34, 0
    %v198 = vsel %vm196, %v35, 0
    %v199 = vsel %vm196, %v36, 0
    %v200 = vsel %vm46, %v197, 0
    %v201 = vand.u32 %v200, 65535
    %v202 = vshrl.u32 %v200, 16
    %v203 = vcvt.s32.f32 %v201
    %v204 = vcvt.s32.f32 %v202
    %205 = vadd.xlane.f32.xlu0 %v203
    %v206 = vpop.xlane.xlu0 %205
    %207 = vadd.xlane.f32.xlu0 %v204
    %v208 = vpop.xlane.xlu0 %207
    %v209 = vcvt.f32.s32 %v206
    %v210 = vcvt.f32.s32 %v208
    %v211 = vshll.u32 %v210, 16
    %v212 = vadd.s32 %v211, %v209
    %v213 = vsel %vm46, %v198, 0
    %v214 = vand.u32 %v213, 65535
    %v215 = vshrl.u32 %v213, 16
    %v216 = vcvt.s32.f32 %v214
    %v217 = vcvt.s32.f32 %v215
    %218 = vadd.xlane.f32.xlu0 %v216
    %v219 = vpop.xlane.xlu0 %218
    %220 = vadd.xlane.f32.xlu0 %v217
    %v221 = vpop.xlane.xlu0 %220
    %v222 = vcvt.f32.s32 %v219
    %v223 = vcvt.f32.s32 %v221
    %v224 = vshll.u32 %v223, 16
    %v225 = vadd.s32 %v224, %v222
    %v226 = vsel %vm46, %v199, 0
    %v227 = vand.u32 %v226, 65535
    %v228 = vshrl.u32 %v226, 16
    %v229 = vcvt.s32.f32 %v227
    %v230 = vcvt.s32.f32 %v228
    %231 = vadd.xlane.f32.xlu0 %v229
    %v232 = vpop.xlane.xlu0 %231
    %233 = vadd.xlane.f32.xlu0 %v230
    %v234 = vpop.xlane.xlu0 %233
    %v235 = vcvt.f32.s32 %v232
    %v236 = vcvt.f32.s32 %v234
    %v237 = vshll.u32 %v236, 16
    %v238 = vadd.s32 %v237, %v235
    %vm239 = vcmp.eq.s32.totalorder %v212, %v41
    %vm240 = vcmp.eq.s32.totalorder %v225, %v41
    %vm241 = vcmp.eq.s32.totalorder %v238, %v41
    %v242 = vsel %vm239, 1, 0
    %v243 = vsel %vm240, 1, 0
    %v244 = vsel %vm241, 1, 0
    %v245 = vadd.s32 %v193, %v242
    %v246 = vadd.s32 %v194, %v243
    %v247 = vadd.s32 %v195, %v244
    %vm248 = vcmp.eq.s32.totalorder %v39, 4
    %v249 = vsel %vm248, %v34, 0
    %v250 = vsel %vm248, %v35, 0
    %v251 = vsel %vm248, %v36, 0
    %v252 = vsel %vm46, %v249, 0
    %v253 = vand.u32 %v252, 65535
    %v254 = vshrl.u32 %v252, 16
    %v255 = vcvt.s32.f32 %v253
    %v256 = vcvt.s32.f32 %v254
    %257 = vadd.xlane.f32.xlu0 %v255
    %v258 = vpop.xlane.xlu0 %257
    %259 = vadd.xlane.f32.xlu0 %v256
    %v260 = vpop.xlane.xlu0 %259
    %v261 = vcvt.f32.s32 %v258
    %v262 = vcvt.f32.s32 %v260
    %v263 = vshll.u32 %v262, 16
    %v264 = vadd.s32 %v263, %v261
    %v265 = vsel %vm46, %v250, 0
    %v266 = vand.u32 %v265, 65535
    %v267 = vshrl.u32 %v265, 16
    %v268 = vcvt.s32.f32 %v266
    %v269 = vcvt.s32.f32 %v267
    %270 = vadd.xlane.f32.xlu0 %v268
    %v271 = vpop.xlane.xlu0 %270
    %272 = vadd.xlane.f32.xlu0 %v269
    %v273 = vpop.xlane.xlu0 %272
    %v274 = vcvt.f32.s32 %v271
    %v275 = vcvt.f32.s32 %v273
    %v276 = vshll.u32 %v275, 16
    %v277 = vadd.s32 %v276, %v274
    %v278 = vsel %vm46, %v251, 0
    %v279 = vand.u32 %v278, 65535
    %v280 = vshrl.u32 %v278, 16
    %v281 = vcvt.s32.f32 %v279
    %v282 = vcvt.s32.f32 %v280
    %283 = vadd.xlane.f32.xlu0 %v281
    %v284 = vpop.xlane.xlu0 %283
    %285 = vadd.xlane.f32.xlu0 %v282
    %v286 = vpop.xlane.xlu0 %285
    %v287 = vcvt.f32.s32 %v284
    %v288 = vcvt.f32.s32 %v286
    %v289 = vshll.u32 %v288, 16
    %v290 = vadd.s32 %v289, %v287
    %vm291 = vcmp.eq.s32.totalorder %v264, %v41
    %vm292 = vcmp.eq.s32.totalorder %v277, %v41
    %vm293 = vcmp.eq.s32.totalorder %v290, %v41
    %v294 = vsel %vm291, 1, 0
    %v295 = vsel %vm292, 1, 0
    %v296 = vsel %vm293, 1, 0
    %v297 = vadd.s32 %v245, %v294
    %v298 = vadd.s32 %v246, %v295
    %v299 = vadd.s32 %v247, %v296
    %vm300 = vcmp.eq.s32.totalorder %v39, 5
    %v301 = vsel %vm300, %v34, 0
    %v302 = vsel %vm300, %v35, 0
    %v303 = vsel %vm300, %v36, 0
    %v304 = vsel %vm46, %v301, 0
    %v305 = vand.u32 %v304, 65535
    %v306 = vshrl.u32 %v304, 16
    %v307 = vcvt.s32.f32 %v305
    %v308 = vcvt.s32.f32 %v306
    %309 = vadd.xlane.f32.xlu0 %v307
    %v310 = vpop.xlane.xlu0 %309
    %311 = vadd.xlane.f32.xlu0 %v308
    %v312 = vpop.xlane.xlu0 %311
    %v313 = vcvt.f32.s32 %v310
    %v314 = vcvt.f32.s32 %v312
    %v315 = vshll.u32 %v314, 16
    %v316 = vadd.s32 %v315, %v313
    %v317 = vsel %vm46, %v302, 0
    %v318 = vand.u32 %v317, 65535
    %v319 = vshrl.u32 %v317, 16
    %v320 = vcvt.s32.f32 %v318
    %v321 = vcvt.s32.f32 %v319
    %322 = vadd.xlane.f32.xlu0 %v320
    %v323 = vpop.xlane.xlu0 %322
    %324 = vadd.xlane.f32.xlu0 %v321
    %v325 = vpop.xlane.xlu0 %324
    %v326 = vcvt.f32.s32 %v323
    %v327 = vcvt.f32.s32 %v325
    %v328 = vshll.u32 %v327, 16
    %v329 = vadd.s32 %v328, %v326
    %v330 = vsel %vm46, %v303, 0
    %v331 = vand.u32 %v330, 65535
    %v332 = vshrl.u32 %v330, 16
    %v333 = vcvt.s32.f32 %v331
    %v334 = vcvt.s32.f32 %v332
    %335 = vadd.xlane.f32.xlu0 %v333
    %v336 = vpop.xlane.xlu0 %335
    %337 = vadd.xlane.f32.xlu0 %v334
    %v338 = vpop.xlane.xlu0 %337
    %v339 = vcvt.f32.s32 %v336
    %v340 = vcvt.f32.s32 %v338
    %v341 = vshll.u32 %v340, 16
    %v342 = vadd.s32 %v341, %v339
    %vm343 = vcmp.eq.s32.totalorder %v316, %v41
    %vm344 = vcmp.eq.s32.totalorder %v329, %v41
    %vm345 = vcmp.eq.s32.totalorder %v342, %v41
    %v346 = vsel %vm343, 1, 0
    %v347 = vsel %vm344, 1, 0
    %v348 = vsel %vm345, 1, 0
    %v349 = vadd.s32 %v297, %v346
    %v350 = vadd.s32 %v298, %v347
    %v351 = vadd.s32 %v299, %v348
    %vm352 = vcmp.eq.s32.totalorder %v39, 6
    %v353 = vsel %vm352, %v34, 0
    %v354 = vsel %vm352, %v35, 0
    %v355 = vsel %vm352, %v36, 0
    %v356 = vsel %vm46, %v353, 0
    %v357 = vand.u32 %v356, 65535
    %v358 = vshrl.u32 %v356, 16
    %v359 = vcvt.s32.f32 %v357
    %v360 = vcvt.s32.f32 %v358
    %361 = vadd.xlane.f32.xlu0 %v359
    %v362 = vpop.xlane.xlu0 %361
    %363 = vadd.xlane.f32.xlu0 %v360
    %v364 = vpop.xlane.xlu0 %363
    %v365 = vcvt.f32.s32 %v362
    %v366 = vcvt.f32.s32 %v364
    %v367 = vshll.u32 %v366, 16
    %v368 = vadd.s32 %v367, %v365
    %v369 = vsel %vm46, %v354, 0
    %v370 = vand.u32 %v369, 65535
    %v371 = vshrl.u32 %v369, 16
    %v372 = vcvt.s32.f32 %v370
    %v373 = vcvt.s32.f32 %v371
    %374 = vadd.xlane.f32.xlu0 %v372
    %v375 = vpop.xlane.xlu0 %374
    %376 = vadd.xlane.f32.xlu0 %v373
    %v377 = vpop.xlane.xlu0 %376
    %v378 = vcvt.f32.s32 %v375
    %v379 = vcvt.f32.s32 %v377
    %v380 = vshll.u32 %v379, 16
    %v381 = vadd.s32 %v380, %v378
    %v382 = vsel %vm46, %v355, 0
    %v383 = vand.u32 %v382, 65535
    %v384 = vshrl.u32 %v382, 16
    %v385 = vcvt.s32.f32 %v383
    %v386 = vcvt.s32.f32 %v384
    %387 = vadd.xlane.f32.xlu0 %v385
    %v388 = vpop.xlane.xlu0 %387
    %389 = vadd.xlane.f32.xlu0 %v386
    %v390 = vpop.xlane.xlu0 %389
    %v391 = vcvt.f32.s32 %v388
    %v392 = vcvt.f32.s32 %v390
    %v393 = vshll.u32 %v392, 16
    %v394 = vadd.s32 %v393, %v391
    %vm395 = vcmp.eq.s32.totalorder %v368, %v41
    %vm396 = vcmp.eq.s32.totalorder %v381, %v41
    %vm397 = vcmp.eq.s32.totalorder %v394, %v41
    %v398 = vsel %vm395, 1, 0
    %v399 = vsel %vm396, 1, 0
    %v400 = vsel %vm397, 1, 0
    %v401 = vadd.s32 %v349, %v398
    %v402 = vadd.s32 %v350, %v399
    %v403 = vadd.s32 %v351, %v400
    %vm404 = vcmp.eq.s32.totalorder %v39, 7
    %v405 = vsel %vm404, %v34, 0
    %v406 = vsel %vm404, %v35, 0
    %v407 = vsel %vm404, %v36, 0
    %v408 = vsel %vm46, %v405, 0
    %v409 = vand.u32 %v408, 65535
    %v410 = vshrl.u32 %v408, 16
    %v411 = vcvt.s32.f32 %v409
    %v412 = vcvt.s32.f32 %v410
    %413 = vadd.xlane.f32.xlu0 %v411
    %v414 = vpop.xlane.xlu0 %413
    %415 = vadd.xlane.f32.xlu0 %v412
    %v416 = vpop.xlane.xlu0 %415
    %v417 = vcvt.f32.s32 %v414
    %v418 = vcvt.f32.s32 %v416
    %v419 = vshll.u32 %v418, 16
    %v420 = vadd.s32 %v419, %v417
    %v421 = vsel %vm46, %v406, 0
    %v422 = vand.u32 %v421, 65535
    %v423 = vshrl.u32 %v421, 16
    %v424 = vcvt.s32.f32 %v422
    %v425 = vcvt.s32.f32 %v423
    %426 = vadd.xlane.f32.xlu0 %v424
    %v427 = vpop.xlane.xlu0 %426
    %428 = vadd.xlane.f32.xlu0 %v425
    %v429 = vpop.xlane.xlu0 %428
    %v430 = vcvt.f32.s32 %v427
    %v431 = vcvt.f32.s32 %v429
    %v432 = vshll.u32 %v431, 16
    %v433 = vadd.s32 %v432, %v430
    %v434 = vsel %vm46, %v407, 0
    %v435 = vand.u32 %v434, 65535
    %v436 = vshrl.u32 %v434, 16
    %v437 = vcvt.s32.f32 %v435
    %v438 = vcvt.s32.f32 %v436
    %439 = vadd.xlane.f32.xlu0 %v437
    %v440 = vpop.xlane.xlu0 %439
    %441 = vadd.xlane.f32.xlu0 %v438
    %v442 = vpop.xlane.xlu0 %441
    %v443 = vcvt.f32.s32 %v440
    %v444 = vcvt.f32.s32 %v442
    %v445 = vshll.u32 %v444, 16
    %v446 = vadd.s32 %v445, %v443
    %vm447 = vcmp.eq.s32.totalorder %v420, %v41
    %vm448 = vcmp.eq.s32.totalorder %v433, %v41
    %vm449 = vcmp.eq.s32.totalorder %v446, %v41
    %v450 = vsel %vm447, 1, 0
    %v451 = vsel %vm448, 1, 0
    %v452 = vsel %vm449, 1, 0
    %v453 = vadd.s32 %v401, %v450
    %v454 = vadd.s32 %v402, %v451
    %v455 = vadd.s32 %v403, %v452
    %v456 = vld [vmem:[#allocation2] sm:$0xff]
    %v457 = vld [vmem:[#allocation2 + $0x8] sm:$0xff]
    %v458 = vld [vmem:[#allocation2 + $0x10] sm:$0xff]
    %v459 = vcvt.s32.f32 %v453
    %v460 = vcvt.s32.f32 %v454
    %v461 = vcvt.s32.f32 %v455
    %v462 = vld [vmem:[%s1] sm:$0xff]
    %v463 = vld [vmem:[%s1 + $0x8] sm:$0xff]
    %v464 = vld [vmem:[%s1 + $0x10] sm:$0xff]
    %v465 = vld [vmem:[%s1 + $0x18] sm:$0xff]
    %vm466 = vcmask 261120
    %v468 = vsel %vm466, %v459, 0
    %v471 = vsel %vm466, %v460, 0
    %v474 = vsel %vm466, %v461, 0
    %476 = vmatprep.subr.mxu0 0.0
    %477 = vmatpush1.msra.mxu0 0.0
    %478 = vmatprep.subr.mxu0 0.0
    %479 = vmatpush1.msra.mxu0 0.0
    %480 = vmatprep.subr.mxu0 0.0
    %481 = vmatpush1.msra.mxu0 0.0
    %482 = vmatprep.subr.mxu0 0.0
    %483 = vmatpush1.msra.mxu0 0.0
    %484 = vmatprep.subr.mxu0 0.0
    %485 = vmatpush1.msra.mxu0 0.0
    %486 = vmatprep.subr.mxu0 0.0
    %487 = vmatpush1.msra.mxu0 0.0
    %488 = vmatprep.subr.mxu0 0.0
    %489 = vmatpush1.msra.mxu0 0.0
    %490 = vmatprep.subr.mxu0 0.0
    %491 = vmatpush1.msra.mxu0 0.0
    %492 = vmatprep.subr.mxu0 0.0
    %493 = vmatpush1.msra.mxu0 0.0
    %494 = vmatprep.subr.mxu0 0.0
    %495 = vmatpush1.msra.mxu0 0.0
    %496 = vmatprep.subr.mxu0 0.0
    %497 = vmatpush1.msra.mxu0 0.0
    %498 = vmatprep.subr.mxu0 0.0
    %499 = vmatpush1.msra.mxu0 0.0
    %500 = vmatprep.subr.mxu0 0.0
    %501 = vmatpush1.msra.mxu0 %v465
    %502 = vmatprep.subr.mxu0 0.0
    %503 = vmatpush1.msra.mxu0 %v464
    %504 = vmatprep.subr.mxu0 0.0
    %505 = vmatpush1.msra.mxu0 %v463
    %506 = vmatprep.subr.mxu0 0.0
    %507 = vmatpush1.msra.mxu0 %v462
    %508 = vmatprep.subr.mxu0 0.0
    %509 = vmatpush2.msra.mxu0 0.0
    %510 = vmatprep.subr.mxu0 0.0
    %511 = vmatpush2.msra.mxu0 0.0
    %512 = vmatprep.subr.mxu0 0.0
    %513 = vmatpush2.msra.mxu0 0.0
    %514 = vmatprep.subr.mxu0 0.0
    %515 = vmatpush2.msra.mxu0 0.0
    %516 = vmatprep.subr.mxu0 0.0
    %517 = vmatpush2.msra.mxu0 0.0
    %518 = vmatprep.subr.mxu0 0.0
    %519 = vmatpush2.msra.mxu0 0.0
    %520 = vmatprep.subr.mxu0 0.0
    %521 = vmatpush2.msra.mxu0 0.0
    %522 = vmatprep.subr.mxu0 0.0
    %523 = vmatpush2.msra.mxu0 0.0
    %524 = vmatprep.subr.mxu0 0.0
    %525 = vmatpush2.msra.mxu0 0.0
    %526 = vmatprep.subr.mxu0 0.0
    %527 = vmatpush2.msra.mxu0 0.0
    %528 = vmatprep.subr.mxu0 0.0
    %529 = vmatpush2.msra.mxu0 0.0
    %530 = vmatprep.subr.mxu0 0.0
    %531 = vmatpush2.msra.mxu0 0.0
    %532 = vmatprep.subr.mxu0 0.0
    %533 = vmatpush2.msra.mxu0 0.0
    %534 = vmatprep.subr.mxu0 0.0
    %535 = vmatpush2.msra.mxu0 0.0
    %536 = vmatprep.subr.mxu0 0.0
    %537 = vmatpush2.msra.mxu0 0.0
    %538 = vmatprep.subr.mxu0 0.0
    %539 = vmatpush2.msra.mxu0 0.0
    %540 = vmatprep.mubr.f32.mxu0 0.0
    %541 = vmatmul.mubr.f32.gmra.mxu0 %v468
    %v542 = vpop.f32.mrf.mxu0
    %v543 = vadd.f32 0.0, %v542
    %v544 = vpop.f32.mrf.mxu0
    %545 = vmatprep.mubr.f32.mxu0 0.0
    %546 = vmatmul.mubr.f32.gmra.mxu0 %v471
    %v547 = vpop.f32.mrf.mxu0
    %v548 = vadd.f32 0.0, %v547
    %v549 = vpop.f32.mrf.mxu0
    %550 = vmatprep.mubr.f32.mxu0 0.0
    %551 = vmatmul.mubr.f32.gmra.mxu0 %v474
    %v552 = vpop.f32.mrf.mxu0
    %v553 = vadd.f32 0.0, %v552
    %v554 = vpop.f32.mrf.mxu0
    %555 = vdwg.mxu0
    %v556 = vadd.f32 %v456, %v543
    %v557 = vadd.f32 %v457, %v548
    %v558 = vadd.f32 %v458, %v553
    %559 = vst [vmem:[#allocation2] sm:$0xff] %v556
    %560 = vst [vmem:[#allocation2 + $0x8] sm:$0xff] %v557
    %561 = vst [vmem:[#allocation2 + $0x10] sm:$0xff] %v558
    // Predicated region
    $region22: #{tpu_custom_call.1} parent=1 // pred_check
      %p562 = pneg %p27
    $region23: #{tpu_custom_call.1} parent=1 // pred_check_branch
      %564 = sbr.rel (%p562) target = $region25
    $region24: #{tpu_custom_call.1} parent=1 // pred_region
      %v565 = vld [vmem:[#allocation3] sm:$0xff]
      %v566 = vld [vmem:[#allocation2] sm:$0xff]
      %v567 = vld [vmem:[#allocation2 + $0x8] sm:$0xff]
      %v568 = vld [vmem:[#allocation2 + $0x10] sm:$0xff]
      %v569 = vmul.f32 %v566, 0.125
      %v570 = vmul.f32 %v567, 0.125
      %v571 = vmul.f32 %v568, 0.125
      %v572 = vlaneseq
      %v573 = vshrl.u32 %v572, 7
      %v574 = vsub.s32 0, %v573
      %v575 = vrot.slane %v565, %v574
      %v576 = vadd.f32 %v569, %v575
      %v577 = vadd.f32 %v570, %v575
      %v578 = vadd.f32 %v571, %v575
      %v579 = vrot.slane %v576, 4
      %v580 = vadd.f32 %v576, %v579
      %v581 = vrot.slane %v580, 2
      %v582 = vadd.f32 %v580, %v581
      %v583 = vrot.slane %v582, 1
      %v584 = vadd.f32 %v582, %v583
      %v585 = vrcp.pop 8.0
      %v586 = vmul.f32 %v584, %v585
      %v587 = vsub.f32 %v576, %v586
      %v588 = vmul.f32 %v587, %v587
      %v589 = vrot.slane %v588, 4
      %v590 = vadd.f32 %v588, %v589
      %v591 = vrot.slane %v590, 2
      %v592 = vadd.f32 %v590, %v591
      %v593 = vrot.slane %v592, 1
      %v594 = vadd.f32 %v592, %v593
      %v595 = vmul.f32 %v594, %v585
      %v596 = vadd.f32 %v595, 1e-05
      %v597 = vrsqrt.pop %v596
      %v598 = vmul.f32 %v587, %v597
      %v599 = vlaneseq
      %v600 = vshrl.u32 %v599, 7
      %v601 = vsub.s32 1, %v600
      %v602 = vrot.slane %v565, %v601
      %v603 = vmul.f32 %v598, %v602
      %v604 = vlaneseq
      %v605 = vshrl.u32 %v604, 7
      %v606 = vsub.s32 2, %v605
      %v607 = vrot.slane %v565, %v606
      %v608 = vadd.f32 %v603, %v607
      %609 = vadd.xlane.f32.xlu0 %v608
      %v610 = vpop.xlane.xlu0 %609
      %v611 = vmul.f32 %v610, 0.03125
      %v612 = vmul.f32 %v608, %v608
      %613 = vadd.xlane.f32.xlu0 %v612
      %v614 = vpop.xlane.xlu0 %613
      %v615 = vmul.f32 %v614, 0.03125
      %v616 = vmul.f32 %v611, %v611
      %v617 = vsub.f32 %v615, %v616
      %v618 = vsub.f32 %v608, %v611
      %v619 = vadd.f32 %v617, 1e-05
      %v620 = vrsqrt.pop %v619
      %v621 = vmul.f32 %v618, %v620
      %v622 = vlaneseq
      %v623 = vshrl.u32 %v622, 7
      %v624 = vsub.s32 3, %v623
      %v625 = vrot.slane %v565, %v624
      %v626 = vmul.f32 %v621, %v625
      %v627 = vlaneseq
      %v628 = vshrl.u32 %v627, 7
      %v629 = vsub.s32 4, %v628
      %v630 = vrot.slane %v565, %v629
      %v631 = vadd.f32 %v626, %v630
      %632 = vst [vmem:[#allocation6] sm:$0xff] %v631
      %v633 = vrot.slane %v577, 4
      %v634 = vadd.f32 %v577, %v633
      %v635 = vrot.slane %v634, 2
      %v636 = vadd.f32 %v634, %v635
      %v637 = vrot.slane %v636, 1
      %v638 = vadd.f32 %v636, %v637
      %v639 = vmul.f32 %v638, %v585
      %v640 = vsub.f32 %v577, %v639
      %v641 = vmul.f32 %v640, %v640
      %v642 = vrot.slane %v641, 4
      %v643 = vadd.f32 %v641, %v642
      %v644 = vrot.slane %v643, 2
      %v645 = vadd.f32 %v643, %v644
      %v646 = vrot.slane %v645, 1
      %v647 = vadd.f32 %v645, %v646
      %v648 = vmul.f32 %v647, %v585
      %v649 = vadd.f32 %v648, 1e-05
      %v650 = vrsqrt.pop %v649
      %v651 = vmul.f32 %v640, %v650
      %v652 = vmul.f32 %v651, %v602
      %v653 = vadd.f32 %v652, %v607
      %654 = vadd.xlane.f32.xlu0 %v653
      %v655 = vpop.xlane.xlu0 %654
      %v656 = vmul.f32 %v655, 0.03125
      %v657 = vmul.f32 %v653, %v653
      %658 = vadd.xlane.f32.xlu0 %v657
      %v659 = vpop.xlane.xlu0 %658
      %v660 = vmul.f32 %v659, 0.03125
      %v661 = vmul.f32 %v656, %v656
      %v662 = vsub.f32 %v660, %v661
      %v663 = vsub.f32 %v653, %v656
      %v664 = vadd.f32 %v662, 1e-05
      %v665 = vrsqrt.pop %v664
      %v666 = vmul.f32 %v663, %v665
      %v667 = vmul.f32 %v666, %v625
      %v668 = vadd.f32 %v667, %v630
      %669 = vst [vmem:[#allocation6 + $0x8] sm:$0xff] %v668
      %v670 = vrot.slane %v578, 4
      %v671 = vadd.f32 %v578, %v670
      %v672 = vrot.slane %v671, 2
      %v673 = vadd.f32 %v671, %v672
      %v674 = vrot.slane %v673, 1
      %v675 = vadd.f32 %v673, %v674
      %v676 = vmul.f32 %v675, %v585
      %v677 = vsub.f32 %v578, %v676
      %v678 = vmul.f32 %v677, %v677
      %v679 = vrot.slane %v678, 4
      %v680 = vadd.f32 %v678, %v679
      %v681 = vrot.slane %v680, 2
      %v682 = vadd.f32 %v680, %v681
      %v683 = vrot.slane %v682, 1
      %v684 = vadd.f32 %v682, %v683
      %v685 = vmul.f32 %v684, %v585
      %v686 = vadd.f32 %v685, 1e-05
      %v687 = vrsqrt.pop %v686
      %v688 = vmul.f32 %v677, %v687
      %v689 = vmul.f32 %v688, %v602
      %v690 = vadd.f32 %v689, %v607
      %691 = vadd.xlane.f32.xlu0 %v690
      %v692 = vpop.xlane.xlu0 %691
      %v693 = vmul.f32 %v692, 0.03125
      %v694 = vmul.f32 %v690, %v690
      %695 = vadd.xlane.f32.xlu0 %v694
      %v696 = vpop.xlane.xlu0 %695
      %v697 = vmul.f32 %v696, 0.03125
      %v698 = vmul.f32 %v693, %v693
      %v699 = vsub.f32 %v697, %v698
      %v700 = vsub.f32 %v690, %v693
      %v701 = vadd.f32 %v699, 1e-05
      %v702 = vrsqrt.pop %v701
      %v703 = vmul.f32 %v700, %v702
      %v704 = vmul.f32 %v703, %v625
      %v705 = vadd.f32 %v704, %v630
      %706 = vst [vmem:[#allocation6 + $0x10] sm:$0xff] %v705
    $region25: #{tpu_custom_call.1} parent=1 // pred_fallthru
      _
    // Predicated region
    $region26: #{tpu_custom_call.1} parent=1 // pred_check
      _
    $region27: #{tpu_custom_call.1} parent=1 // pred_check_branch
      %708 = sbr.rel (0) target = $region29
    $region28: #{tpu_custom_call.1} parent=1 // pred_region
      %s710 = ssub.s32 384, 384
      %711 = vsyncadd [#allocation5], %s710
      %s712 = sshll.u32 [#allocation6], 4
      %s713 = int_to_ptr.vmem [resolvable:$true] %s712
      %718 = dma.vmem_to_hbm [thread:$0]  %s713, 384, %s3, [#allocation5], 128, 128, 8
    $region29: #{tpu_custom_call.1} parent=1 // pred_fallthru
      _
    // Predicated region
    $region30: #{tpu_custom_call.1} parent=1 // pred_check
      _
    $region31: #{tpu_custom_call.1} parent=1 // pred_check_branch
      %720 = sbr.rel (0) target = $region33
    $region32: #{tpu_custom_call.1} parent=1 // pred_region
      %721 = dma.done [#allocation5], 384
    $region33: #{tpu_custom_call.1} parent=1 // pred_fallthru
      _
    %722 = vsyncpa [#allocation4], 1
    %723 = vsyncpa [#allocation5], 1

</llo_original>
